<compile_context>
chip_gen: v7x
topology: tpu7x:2x2x1
jax: 0.10.0
libtpu: 0.0.40
codegen_flags: <defaults>
</compile_context>

<pallas_src>
import functools

import jax
import jax.numpy as jnp
import numpy as np
from jax.experimental import pallas as pl
from jax.experimental.pallas import tpu as pltpu

_LANE = 128


def _round_up(n, m):
    return ((n + m - 1) // m) * m


def _mmoe_kernel(x_ref, wcat_ref, bcat_ref, twb_ref, tbb_ref, out_ref,
                 *, E, T, Cout, max_nc):
    """One batch tile of the full MMoE-DANN forward.

    x_ref    : (bt, Cin*HW)         flattened activations (pool fused into W)
    wcat_ref : (Cin*HW, CATP)       [expert | gate] weights / HW, zero padded
    bcat_ref : (1, CATP)            [expert | gate] biases,       zero padded
    twb_ref  : (T*Cout, T*max_nc)   block-diagonal tower weights
    tbb_ref  : (1, T*max_nc)        concatenated tower biases
    out_ref  : (bt, OUTP)           [logits_0|..|logits_{T-1}|gate_0|..|pad]
    """
    bt = x_ref.shape[0]

    # Fused pool + expert + gate projection: one MXU dot, K = Cin*HW.
    proj = jnp.dot(x_ref[...], wcat_ref[...],
                   preferred_element_type=jnp.float32) + bcat_ref[...]

    goff = E * Cout
    gates_list = []
    mixed_list = []
    for t in range(T):
        # Gate softmax over the E true columns (T, E are tiny and static).
        gl = proj[:, goff + t * E: goff + (t + 1) * E]            # (bt, E)
        gl = gl - jnp.max(gl, axis=-1, keepdims=True)
        p = jnp.exp(gl)
        w = p / jnp.sum(p, axis=-1, keepdims=True)                # (bt, E)
        gates_list.append(w)

        # Unrolled lane-dense expert mixture: (bt, Cout) accumulation.
        mixed = w[:, 0:1] * proj[:, 0:Cout]
        for e in range(1, E):
            mixed = mixed + w[:, e:e + 1] * proj[:, e * Cout:(e + 1) * Cout]
        mixed_list.append(mixed)                                  # (bt, Cout)

    # GRL (WarmStartGradientReverseLayer) is identity in the forward pass.

    # All T towers as one MXU dot against a block-diagonal weight.
    mixed_cat = jnp.concatenate(mixed_list, axis=-1)              # (bt, T*Cout)
    logits = jnp.dot(mixed_cat, twb_ref[...],
                     preferred_element_type=jnp.float32) + tbb_ref[...]

    # Pack everything into one lane-dense output slab (full-width vst).
    gates_cat = jnp.concatenate(gates_list, axis=-1)              # (bt, T*E)
    slab = jnp.concatenate([logits, gates_cat], axis=-1)
    pad = out_ref.shape[-1] - slab.shape[-1]
    if pad > 0:
        slab = jnp.concatenate(
            [slab, jnp.zeros((bt, pad), jnp.float32)], axis=-1)
    out_ref[...] = slab


def task_mmoe_dann_forward(x, params, num_task_classes):
    """Runs the whole MMoE-DANN forward in one pallas_call."""
    ew, eb, gw, gb, tw, tb = params
    B, Cin, H, W = x.shape
    E, _, Cout = ew.shape
    T = len(num_task_classes)
    max_nc = tw.shape[-1]
    HW = H * W

    cat_w = E * Cout + T * E
    CATP = _round_up(cat_w, _LANE)          # fused projection width (lane-dense)
    out_w = T * max_nc + T * E
    OUTP = _round_up(out_w, _LANE)          # single packed output slab width

    # ---- wrapper-side packing (cheap XLA ops, outside the kernel) ----------
    x2 = x.reshape(B, Cin * HW).astype(jnp.float32)

    w_experts = jnp.transpose(ew, (1, 0, 2)).reshape(Cin, E * Cout)
    w_gates = jnp.transpose(gw, (1, 0, 2)).reshape(Cin, T * E)
    wcat = jnp.zeros((Cin, CATP), jnp.float32)
    wcat = wcat.at[:, :E * Cout].set(w_experts)
    wcat = wcat.at[:, E * Cout:cat_w].set(w_gates)
    # Fold the average pool into the weights: row (c*HW + hw) <- wcat[c] / HW.
    wcat_full = jnp.broadcast_to(
        wcat[:, None, :], (Cin, HW, CATP)).reshape(Cin * HW, CATP) / float(HW)

    bcat = jnp.zeros((1, CATP), jnp.float32)
    bcat = bcat.at[0, :E * Cout].set(eb.reshape(E * Cout))
    bcat = bcat.at[0, E * Cout:cat_w].set(gb.reshape(T * E))

    # Block-diagonal tower weights so all T heads run as one dot.
    twb = jnp.zeros((T * Cout, T * max_nc), jnp.float32)
    tbb = jnp.zeros((1, T * max_nc), jnp.float32)
    for t in range(T):
        twb = twb.at[t * Cout:(t + 1) * Cout,
                     t * max_nc:(t + 1) * max_nc].set(tw[t])
        tbb = tbb.at[0, t * max_nc:(t + 1) * max_nc].set(tb[t])

    # ---- batch tiling: fixed bt from a VMEM budget, padded batch -----------
    x_row_bytes = Cin * HW * 4
    tile_budget = 16 << 20                      # double-buffered x + out slab
    per_row = 2 * x_row_bytes + 2 * OUTP * 4
    bt = max(8, min(1024, (tile_budget // per_row) // 8 * 8))
    # Keep >= 2 grid steps when the batch allows (megacore split on v7x).
    half = _round_up(max(1, -(-B // 2)), 8)
    bt = min(bt, max(8, half))

    Bp = _round_up(B, bt)
    if Bp != B:
        x2 = jnp.concatenate(
            [x2, jnp.zeros((Bp - B, Cin * HW), jnp.float32)], axis=0)
    grid = (Bp // bt,)

    weight_bytes = 4 * (Cin * HW * CATP + CATP
                        + T * Cout * T * max_nc + T * max_nc)
    need = 2 * bt * x_row_bytes + 2 * bt * OUTP * 4 + 2 * weight_bytes
    vmem_limit = int(min(56 << 20, max(32 << 20, 2 * need)))

    kernel = functools.partial(_mmoe_kernel, E=E, T=T, Cout=Cout,
                               max_nc=max_nc)

    out = pl.pallas_call(
        kernel,
        out_shape=jax.ShapeDtypeStruct((Bp, OUTP), jnp.float32),
        grid=grid,
        in_specs=[
            pl.BlockSpec((bt, Cin * HW), lambda b: (b, 0)),
            pl.BlockSpec((Cin * HW, CATP), lambda b: (0, 0)),
            pl.BlockSpec((1, CATP), lambda b: (0, 0)),
            pl.BlockSpec((T * Cout, T * max_nc), lambda b: (0, 0)),
            pl.BlockSpec((1, T * max_nc), lambda b: (0, 0)),
        ],
        out_specs=pl.BlockSpec((bt, OUTP), lambda b: (b, 0)),
        compiler_params=pltpu.CompilerParams(
            dimension_semantics=("parallel",),
            vmem_limit_bytes=vmem_limit),
    )(x2, wcat_full, bcat, twb, tbb)

    out = out[:B]

    # Mirror the PyTorch return structure:
    #   [tower_0_logits, ..., tower_{T-1}_logits, task_weights]
    outs = []
    for t, nc in enumerate(num_task_classes):
        k = abs(nc)
        outs.append(out[:, t * max_nc: t * max_nc + k])
    goff = T * max_nc
    task_weights = [out[:, goff + t * E: goff + (t + 1) * E][:, None, :]
                    for t in range(T)]                           # (B, 1, E)
    outs.append(task_weights)
    return outs


def _reference_forward(x, params, num_task_classes):
    """Plain-JAX reference (mirrors the PyTorch forward semantics)."""
    ew, eb, gw, gb, tw, tb = params
    pooled = jnp.mean(x, axis=(2, 3))                         # (B, Cin)
    ef = jnp.einsum('bc,ecd->bed', pooled, ew) + eb[None]     # (B, E, Cout)
    outs = []
    weights = []
    for t, nc in enumerate(num_task_classes):
        k = abs(nc)
        gl = pooled @ gw[t] + gb[t]                           # (B, E)
        w = jax.nn.softmax(gl, axis=1)                        # (B, E)
        weights.append(w[:, None, :])
        mixed = jnp.einsum('be,bec->bc', w, ef)               # (B, Cout)
        outs.append(mixed @ tw[t, :, :k] + tb[t, :k])
    outs.append(weights)
    return outs


if __name__ == "__main__":
    # Small, deterministic config.
    B, Cin, H, W = 2, 4, 16, 16
    Cout = 32
    E = 3                                   # number of experts
    num_task_classes = [3, -2]              # negative => DANN branch (GRL)
    T = len(num_task_classes)
    max_nc = max(abs(c) for c in num_task_classes)

    key = jax.random.PRNGKey(0)
    kx, k0, k1, k2, k3, k4, k5 = jax.random.split(key, 7)

    x = jax.random.normal(kx, (B, Cin, H, W), jnp.float32)

    ew = 0.1 * jax.random.normal(k0, (E, Cin, Cout), jnp.float32)
    eb = 0.01 * jax.random.normal(k1, (E, Cout), jnp.float32)
    gw = 0.1 * jax.random.normal(k2, (T, Cin, E), jnp.float32)
    gb = 0.01 * jax.random.normal(k3, (T, E), jnp.float32)

    tw = jnp.zeros((T, Cout, max_nc), jnp.float32)
    tb = jnp.zeros((T, max_nc), jnp.float32)
    tkeys = jax.random.split(k4, T)
    bkeys = jax.random.split(k5, T)
    for t, nc in enumerate(num_task_classes):
        k = abs(nc)
        tw = tw.at[t, :, :k].set(
            0.1 * jax.random.normal(tkeys[t], (Cout, k), jnp.float32))
        tb = tb.at[t, :k].set(
            0.01 * jax.random.normal(bkeys[t], (k,), jnp.float32))

    params = (ew, eb, gw, gb, tw, tb)

    outs = task_mmoe_dann_forward(x, params, num_task_classes)
    outs = jax.tree_util.tree_map(lambda a: jax.block_until_ready(a), outs)

    # Numerical check against a plain-JAX reference.
    ref = _reference_forward(x, params, num_task_classes)
    for t in range(T):
        np.testing.assert_allclose(np.asarray(outs[t]), np.asarray(ref[t]),
                                   rtol=1e-5, atol=1e-5)
        np.testing.assert_allclose(np.asarray(outs[-1][t]),
                                   np.asarray(ref[-1][t]),
                                   rtol=1e-5, atol=1e-5)

    print("KERNEL_OK")
</pallas_src>

<mosaic_0001>
module attributes {stable_mosaic.version = 11 : i64} {
  func.func @_mmoe_kernel(%arg0: i32, %arg1: memref<8x1024xf32, #tpu.memory_space<vmem>>, %arg2: memref<1024x128xf32, #tpu.memory_space<vmem>>, %arg3: memref<1x128xf32, #tpu.memory_space<vmem>>, %arg4: memref<64x6xf32, #tpu.memory_space<vmem>>, %arg5: memref<1x6xf32, #tpu.memory_space<vmem>>, %arg6: memref<8x128xf32, #tpu.memory_space<vmem>>) attributes {dimension_semantics = [#tpu.dimension_semantics<parallel>], iteration_bounds = array<i64: 1>, scalar_prefetch = 0 : i64, scratch_operands = 0 : i64, tpu.core_type = #tpu.core_type<tc>, window_params = [{transform_indices = @transform_0, window_bounds = array<i64: 8, 1024>}, {pipeline_mode = #tpu.pipeline_mode<synchronous>, transform_indices = @transform_1, window_bounds = array<i64: 1024, 128>}, {pipeline_mode = #tpu.pipeline_mode<synchronous>, transform_indices = @transform_2, window_bounds = array<i64: 1, 128>}, {pipeline_mode = #tpu.pipeline_mode<synchronous>, transform_indices = @transform_3, window_bounds = array<i64: 64, 6>}, {pipeline_mode = #tpu.pipeline_mode<synchronous>, transform_indices = @transform_4, window_bounds = array<i64: 1, 6>}, {transform_indices = @transform_5, window_bounds = array<i64: 8, 128>}]} {
    %c0 = arith.constant 0 : index
    %c0_0 = arith.constant 0 : index
    %0 = vector.load %arg1[%c0, %c0_0] : memref<8x1024xf32, #tpu.memory_space<vmem>>, vector<8x1024xf32>
    %c0_1 = arith.constant 0 : index
    %c0_2 = arith.constant 0 : index
    %1 = vector.load %arg2[%c0_1, %c0_2] : memref<1024x128xf32, #tpu.memory_space<vmem>>, vector<1024x128xf32>
    %cst = arith.constant dense<0.000000e+00> : vector<8x128xf32>
    %2 = tpu.matmul %0, %1, %cst {dimension_numbers = #tpu.dot_dimension_numbers<[1], [0], [0], [1], [0, 0, 1, 1], [], []>} : vector<8x1024xf32>, vector<1024x128xf32>, vector<8x128xf32> -> vector<8x128xf32>
    %c0_3 = arith.constant 0 : index
    %c0_4 = arith.constant 0 : index
    %3 = vector.load %arg3[%c0_3, %c0_4] : memref<1x128xf32, #tpu.memory_space<vmem>>, vector<1x128xf32>
    %4 = vector.broadcast %3 : vector<1x128xf32> to vector<8x128xf32>
    %5 = arith.addf %2, %4 : vector<8x128xf32>
    %6 = vector.extract_strided_slice %5 {offsets = [0, 96], sizes = [8, 3], strides = [1, 1]} : vector<8x128xf32> to vector<8x3xf32>
    %cst_5 = arith.constant dense<0xFF800000> : vector<8xf32>
    %7 = vector.multi_reduction <maximumf>, %6, %cst_5 [1] : vector<8x3xf32> to vector<8xf32>
    %8 = vector.shape_cast %7 : vector<8xf32> to vector<8x1xf32>
    %9 = vector.broadcast %8 : vector<8x1xf32> to vector<8x3xf32>
    %10 = arith.subf %6, %9 : vector<8x3xf32>
    %11 = math.exp %10 : vector<8x3xf32>
    %cst_6 = arith.constant dense<0.000000e+00> : vector<8xf32>
    %12 = vector.multi_reduction <add>, %11, %cst_6 [1] : vector<8x3xf32> to vector<8xf32>
    %13 = vector.shape_cast %12 : vector<8xf32> to vector<8x1xf32>
    %14 = vector.broadcast %13 : vector<8x1xf32> to vector<8x3xf32>
    %15 = arith.divf %11, %14 : vector<8x3xf32>
    %16 = vector.extract_strided_slice %15 {offsets = [0, 0], sizes = [8, 1], strides = [1, 1]} : vector<8x3xf32> to vector<8x1xf32>
    %17 = vector.extract_strided_slice %5 {offsets = [0, 0], sizes = [8, 32], strides = [1, 1]} : vector<8x128xf32> to vector<8x32xf32>
    %18 = vector.broadcast %16 : vector<8x1xf32> to vector<8x32xf32>
    %19 = arith.mulf %18, %17 : vector<8x32xf32>
    %20 = vector.extract_strided_slice %15 {offsets = [0, 1], sizes = [8, 1], strides = [1, 1]} : vector<8x3xf32> to vector<8x1xf32>
    %21 = vector.extract_strided_slice %5 {offsets = [0, 32], sizes = [8, 32], strides = [1, 1]} : vector<8x128xf32> to vector<8x32xf32>
    %22 = vector.broadcast %20 : vector<8x1xf32> to vector<8x32xf32>
    %23 = arith.mulf %22, %21 : vector<8x32xf32>
    %24 = arith.addf %19, %23 : vector<8x32xf32>
    %25 = vector.extract_strided_slice %15 {offsets = [0, 2], sizes = [8, 1], strides = [1, 1]} : vector<8x3xf32> to vector<8x1xf32>
    %26 = vector.extract_strided_slice %5 {offsets = [0, 64], sizes = [8, 32], strides = [1, 1]} : vector<8x128xf32> to vector<8x32xf32>
    %27 = vector.broadcast %25 : vector<8x1xf32> to vector<8x32xf32>
    %28 = arith.mulf %27, %26 : vector<8x32xf32>
    %29 = arith.addf %24, %28 : vector<8x32xf32>
    %30 = vector.extract_strided_slice %5 {offsets = [0, 99], sizes = [8, 3], strides = [1, 1]} : vector<8x128xf32> to vector<8x3xf32>
    %cst_7 = arith.constant dense<0xFF800000> : vector<8xf32>
    %31 = vector.multi_reduction <maximumf>, %30, %cst_7 [1] : vector<8x3xf32> to vector<8xf32>
    %32 = vector.shape_cast %31 : vector<8xf32> to vector<8x1xf32>
    %33 = vector.broadcast %32 : vector<8x1xf32> to vector<8x3xf32>
    %34 = arith.subf %30, %33 : vector<8x3xf32>
    %35 = math.exp %34 : vector<8x3xf32>
    %cst_8 = arith.constant dense<0.000000e+00> : vector<8xf32>
    %36 = vector.multi_reduction <add>, %35, %cst_8 [1] : vector<8x3xf32> to vector<8xf32>
    %37 = vector.shape_cast %36 : vector<8xf32> to vector<8x1xf32>
    %38 = vector.broadcast %37 : vector<8x1xf32> to vector<8x3xf32>
    %39 = arith.divf %35, %38 : vector<8x3xf32>
    %40 = vector.extract_strided_slice %39 {offsets = [0, 0], sizes = [8, 1], strides = [1, 1]} : vector<8x3xf32> to vector<8x1xf32>
    %41 = vector.extract_strided_slice %5 {offsets = [0, 0], sizes = [8, 32], strides = [1, 1]} : vector<8x128xf32> to vector<8x32xf32>
    %42 = vector.broadcast %40 : vector<8x1xf32> to vector<8x32xf32>
    %43 = arith.mulf %42, %41 : vector<8x32xf32>
    %44 = vector.extract_strided_slice %39 {offsets = [0, 1], sizes = [8, 1], strides = [1, 1]} : vector<8x3xf32> to vector<8x1xf32>
    %45 = vector.extract_strided_slice %5 {offsets = [0, 32], sizes = [8, 32], strides = [1, 1]} : vector<8x128xf32> to vector<8x32xf32>
    %46 = vector.broadcast %44 : vector<8x1xf32> to vector<8x32xf32>
    %47 = arith.mulf %46, %45 : vector<8x32xf32>
    %48 = arith.addf %43, %47 : vector<8x32xf32>
    %49 = vector.extract_strided_slice %39 {offsets = [0, 2], sizes = [8, 1], strides = [1, 1]} : vector<8x3xf32> to vector<8x1xf32>
    %50 = vector.extract_strided_slice %5 {offsets = [0, 64], sizes = [8, 32], strides = [1, 1]} : vector<8x128xf32> to vector<8x32xf32>
    %51 = vector.broadcast %49 : vector<8x1xf32> to vector<8x32xf32>
    %52 = arith.mulf %51, %50 : vector<8x32xf32>
    %53 = arith.addf %48, %52 : vector<8x32xf32>
    %54 = tpu.concatenate %29, %53 in 1 : vector<8x32xf32>, vector<8x32xf32> -> vector<8x64xf32>
    %c0_9 = arith.constant 0 : index
    %c0_10 = arith.constant 0 : index
    %55 = vector.load %arg4[%c0_9, %c0_10] : memref<64x6xf32, #tpu.memory_space<vmem>>, vector<64x6xf32>
    %cst_11 = arith.constant dense<0.000000e+00> : vector<8x6xf32>
    %56 = tpu.matmul %54, %55, %cst_11 {dimension_numbers = #tpu.dot_dimension_numbers<[1], [0], [0], [1], [0, 0, 1, 1], [], []>} : vector<8x64xf32>, vector<64x6xf32>, vector<8x6xf32> -> vector<8x6xf32>
    %c0_12 = arith.constant 0 : index
    %c0_13 = arith.constant 0 : index
    %57 = vector.load %arg5[%c0_12, %c0_13] : memref<1x6xf32, #tpu.memory_space<vmem>>, vector<1x6xf32>
    %58 = vector.broadcast %57 : vector<1x6xf32> to vector<8x6xf32>
    %59 = arith.addf %56, %58 : vector<8x6xf32>
    %60 = tpu.concatenate %15, %39 in 1 : vector<8x3xf32>, vector<8x3xf32> -> vector<8x6xf32>
    %61 = tpu.concatenate %59, %60 in 1 : vector<8x6xf32>, vector<8x6xf32> -> vector<8x12xf32>
    %cst_14 = arith.constant 0.000000e+00 : f32
    %62 = vector.broadcast %cst_14 : f32 to vector<8x116xf32>
    %63 = tpu.concatenate %61, %62 in 1 : vector<8x12xf32>, vector<8x116xf32> -> vector<8x128xf32>
    %c0_15 = arith.constant 0 : index
    %c0_16 = arith.constant 0 : index
    %64 = vector.load %arg6[%c0_15, %c0_16] : memref<8x128xf32, #tpu.memory_space<vmem>>, vector<8x128xf32>
    tpu.vector_store %arg6[%c0_15, %c0_16], %63 {strides = array<i32>} : memref<8x128xf32, #tpu.memory_space<vmem>>, vector<8x128xf32>,
    return
  }
  func.func @transform_0(%arg0: i32) -> (i32, i32) {
    %c0_i32 = arith.constant 0 : i32
    %c0_i32_0 = arith.constant 0 : i32
    return %arg0, %c0_i32 : i32, i32
  }
  func.func @transform_1(%arg0: i32) -> (i32, i32) {
    %c0_i32 = arith.constant 0 : i32
    %c0_i32_0 = arith.constant 0 : i32
    %c0_i32_1 = arith.constant 0 : i32
    return %c0_i32, %c0_i32_0 : i32, i32
  }
  func.func @transform_2(%arg0: i32) -> (i32, i32) {
    %c0_i32 = arith.constant 0 : i32
    %c0_i32_0 = arith.constant 0 : i32
    %c0_i32_1 = arith.constant 0 : i32
    return %c0_i32, %c0_i32_0 : i32, i32
  }
  func.func @transform_3(%arg0: i32) -> (i32, i32) {
    %c0_i32 = arith.constant 0 : i32
    %c0_i32_0 = arith.constant 0 : i32
    %c0_i32_1 = arith.constant 0 : i32
    return %c0_i32, %c0_i32_0 : i32, i32
  }
  func.func @transform_4(%arg0: i32) -> (i32, i32) {
    %c0_i32 = arith.constant 0 : i32
    %c0_i32_0 = arith.constant 0 : i32
    %c0_i32_1 = arith.constant 0 : i32
    return %c0_i32, %c0_i32_0 : i32, i32
  }
  func.func @transform_5(%arg0: i32) -> (i32, i32) {
    %c0_i32 = arith.constant 0 : i32
    %c0_i32_0 = arith.constant 0 : i32
    return %arg0, %c0_i32 : i32, i32
  }
}

</mosaic_0001>

<llo_original>
// kernel: tpu_custom_call.1
$region0: #{tpu_custom_call.1}
  #allocation0 [shape = 'u32[]', space=smem, size = 0x4, offset = 0x4, fixed_abs, tag = 'smem constant byte address 0x4 - core index']
  #allocation1 [shape = 'u32[144,128]{1,0:T(1,128)}', space=vmem, size = 0x12000, scoped, tag = 'internal scratch']
  %s0 = inlined_call_operand.vmem [shape: f32[8,1024], index: 0, kind: input, shape index: {}]
  %s1 = inlined_call_operand.hbm [shape: f32[1024,128], index: 1, kind: input, shape index: {}]
  %s2 = inlined_call_operand.vmem [shape: f32[1,128], index: 2, kind: input, shape index: {}]
  %s3 = inlined_call_operand.vmem [shape: f32[64,6], index: 3, kind: input, shape index: {}]
  %s4 = inlined_call_operand.vmem [shape: f32[1,6], index: 4, kind: input, shape index: {}]
  %s5 = inlined_call_operand.hbm [shape: f32[8,128], index: 5, kind: output, shape index: {}]
  %s6 = sld [smem:[#allocation0]]
  $region34: #{tpu_custom_call.1} parent=0
    _
  %s8 = ssub.s32 1, %s6
  %s9 = scalar_select 0, %s8, %s6
  $region1: #{tpu_custom_call.1} parent=0
    #allocation2 [shape = 'u8[524288]{0}', space=vmem, size = 0x80000, scoped, tag = 'input window, operand 1, single buffered']
    #allocation3 [shape = 's32[1]{0}', space=sflag, size = 0x4, scoped, tag = 'scoped memory for tpu_custom_call.1']
    #allocation4 [shape = 's32[1]{0}', space=sflag, size = 0x4, scoped, tag = 'scoped memory for tpu_custom_call.1']
    #allocation5 [shape = 'u8[4096]{0}', space=vmem, size = 0x1000, scoped, tag = 'output window, operand 0, single buffered']
    %10 = vsyncpa [#allocation3], 0
    %11 = vsyncpa [#allocation4], 0
    // Predicated region
    $region2: #{tpu_custom_call.1} parent=1 // pred_check
      _
    $region3: #{tpu_custom_call.1} parent=1 // pred_check_branch
      %13 = sbr.rel (0) target = $region5
    $region4: #{tpu_custom_call.1} parent=1 // pred_region
      _
    $region5: #{tpu_custom_call.1} parent=1 // pred_fallthru
      _
    // Predicated region
    $region6: #{tpu_custom_call.1} parent=1 // pred_check
      _
    $region7: #{tpu_custom_call.1} parent=1 // pred_check_branch
      %15 = sbr.rel (0) target = $region9
    $region8: #{tpu_custom_call.1} parent=1 // pred_region
      %s17 = ssub.s32 16384, 16384
      %18 = vsyncadd [#allocation3], %s17
      %s19 = sshll.u32 [#allocation2], 4
      %s20 = int_to_ptr.vmem [resolvable:$true] %s19
      %25 = dma.hbm_to_vmem [thread:$0]  %s1, 16384, %s20, [#allocation3], 128, 128, 8
    $region9: #{tpu_custom_call.1} parent=1 // pred_fallthru
      _
    // Predicated region
    $region10: #{tpu_custom_call.1} parent=1 // pred_check
      _
    $region11: #{tpu_custom_call.1} parent=1 // pred_check_branch
      %27 = sbr.rel (0) target = $region13
    $region12: #{tpu_custom_call.1} parent=1 // pred_region
      _
    $region13: #{tpu_custom_call.1} parent=1 // pred_fallthru
      _
    // Predicated region
    $region14: #{tpu_custom_call.1} parent=1 // pred_check
      _
    $region15: #{tpu_custom_call.1} parent=1 // pred_check_branch
      %29 = sbr.rel (0) target = $region17
    $region16: #{tpu_custom_call.1} parent=1 // pred_region
      _
    $region17: #{tpu_custom_call.1} parent=1 // pred_fallthru
      _
    // Predicated region
    $region18: #{tpu_custom_call.1} parent=1 // pred_check
      _
    $region19: #{tpu_custom_call.1} parent=1 // pred_check_branch
      %31 = sbr.rel (0) target = $region21
    $region20: #{tpu_custom_call.1} parent=1 // pred_region
      _
    $region21: #{tpu_custom_call.1} parent=1 // pred_fallthru
      _
    // Predicated region
    $region22: #{tpu_custom_call.1} parent=1 // pred_check
      _
    $region23: #{tpu_custom_call.1} parent=1 // pred_check_branch
      %33 = sbr.rel (0) target = $region25
    $region24: #{tpu_custom_call.1} parent=1 // pred_region
      %34 = dma.done [#allocation3], 16384
    $region25: #{tpu_custom_call.1} parent=1 // pred_fallthru
      _
    %v35 = vld [vmem:[%s0] sm:$0xff]
    %v36 = vld [vmem:[%s0 + $0x8] sm:$0xff]
    %v37 = vld [vmem:[%s0 + $0x10] sm:$0xff]
    %v38 = vld [vmem:[%s0 + $0x18] sm:$0xff]
    %v39 = vld [vmem:[%s0 + $0x20] sm:$0xff]
    %v40 = vld [vmem:[%s0 + $0x28] sm:$0xff]
    %v41 = vld [vmem:[%s0 + $0x30] sm:$0xff]
    %v42 = vld [vmem:[%s0 + $0x38] sm:$0xff]
    %v43 = vld [vmem:[#allocation2] sm:$0xff]
    %v44 = vld [vmem:[#allocation2 + $0x8] sm:$0xff]
    %v45 = vld [vmem:[#allocation2 + $0x10] sm:$0xff]
    %v46 = vld [vmem:[#allocation2 + $0x18] sm:$0xff]
    %v47 = vld [vmem:[#allocation2 + $0x20] sm:$0xff]
    %v48 = vld [vmem:[#allocation2 + $0x28] sm:$0xff]
    %v49 = vld [vmem:[#allocation2 + $0x30] sm:$0xff]
    %v50 = vld [vmem:[#allocation2 + $0x38] sm:$0xff]
    %v51 = vld [vmem:[#allocation2 + $0x40] sm:$0xff]
    %v52 = vld [vmem:[#allocation2 + $0x48] sm:$0xff]
    %v53 = vld [vmem:[#allocation2 + $0x50] sm:$0xff]
    %v54 = vld [vmem:[#allocation2 + $0x58] sm:$0xff]
    %v55 = vld [vmem:[#allocation2 + $0x60] sm:$0xff]
    %v56 = vld [vmem:[#allocation2 + $0x68] sm:$0xff]
    %v57 = vld [vmem:[#allocation2 + $0x70] sm:$0xff]
    %v58 = vld [vmem:[#allocation2 + $0x78] sm:$0xff]
    %v59 = vld [vmem:[#allocation2 + $0x80] sm:$0xff]
    %v60 = vld [vmem:[#allocation2 + $0x88] sm:$0xff]
    %v61 = vld [vmem:[#allocation2 + $0x90] sm:$0xff]
    %v62 = vld [vmem:[#allocation2 + $0x98] sm:$0xff]
    %v63 = vld [vmem:[#allocation2 + $0xa0] sm:$0xff]
    %v64 = vld [vmem:[#allocation2 + $0xa8] sm:$0xff]
    %v65 = vld [vmem:[#allocation2 + $0xb0] sm:$0xff]
    %v66 = vld [vmem:[#allocation2 + $0xb8] sm:$0xff]
    %v67 = vld [vmem:[#allocation2 + $0xc0] sm:$0xff]
    %v68 = vld [vmem:[#allocation2 + $0xc8] sm:$0xff]
    %v69 = vld [vmem:[#allocation2 + $0xd0] sm:$0xff]
    %v70 = vld [vmem:[#allocation2 + $0xd8] sm:$0xff]
    %v71 = vld [vmem:[#allocation2 + $0xe0] sm:$0xff]
    %v72 = vld [vmem:[#allocation2 + $0xe8] sm:$0xff]
    %v73 = vld [vmem:[#allocation2 + $0xf0] sm:$0xff]
    %v74 = vld [vmem:[#allocation2 + $0xf8] sm:$0xff]
    %v75 = vld [vmem:[#allocation2 + $0x100] sm:$0xff]
    %v76 = vld [vmem:[#allocation2 + $0x108] sm:$0xff]
    %v77 = vld [vmem:[#allocation2 + $0x110] sm:$0xff]
    %v78 = vld [vmem:[#allocation2 + $0x118] sm:$0xff]
    %v79 = vld [vmem:[#allocation2 + $0x120] sm:$0xff]
    %v80 = vld [vmem:[#allocation2 + $0x128] sm:$0xff]
    %v81 = vld [vmem:[#allocation2 + $0x130] sm:$0xff]
    %v82 = vld [vmem:[#allocation2 + $0x138] sm:$0xff]
    %v83 = vld [vmem:[#allocation2 + $0x140] sm:$0xff]
    %v84 = vld [vmem:[#allocation2 + $0x148] sm:$0xff]
    %v85 = vld [vmem:[#allocation2 + $0x150] sm:$0xff]
    %v86 = vld [vmem:[#allocation2 + $0x158] sm:$0xff]
    %v87 = vld [vmem:[#allocation2 + $0x160] sm:$0xff]
    %v88 = vld [vmem:[#allocation2 + $0x168] sm:$0xff]
    %v89 = vld [vmem:[#allocation2 + $0x170] sm:$0xff]
    %v90 = vld [vmem:[#allocation2 + $0x178] sm:$0xff]
    %v91 = vld [vmem:[#allocation2 + $0x180] sm:$0xff]
    %v92 = vld [vmem:[#allocation2 + $0x188] sm:$0xff]
    %v93 = vld [vmem:[#allocation2 + $0x190] sm:$0xff]
    %v94 = vld [vmem:[#allocation2 + $0x198] sm:$0xff]
    %v95 = vld [vmem:[#allocation2 + $0x1a0] sm:$0xff]
    %v96 = vld [vmem:[#allocation2 + $0x1a8] sm:$0xff]
    %v97 = vld [vmem:[#allocation2 + $0x1b0] sm:$0xff]
    %v98 = vld [vmem:[#allocation2 + $0x1b8] sm:$0xff]
    %v99 = vld [vmem:[#allocation2 + $0x1c0] sm:$0xff]
    %v100 = vld [vmem:[#allocation2 + $0x1c8] sm:$0xff]
    %v101 = vld [vmem:[#allocation2 + $0x1d0] sm:$0xff]
    %v102 = vld [vmem:[#allocation2 + $0x1d8] sm:$0xff]
    %v103 = vld [vmem:[#allocation2 + $0x1e0] sm:$0xff]
    %v104 = vld [vmem:[#allocation2 + $0x1e8] sm:$0xff]
    %v105 = vld [vmem:[#allocation2 + $0x1f0] sm:$0xff]
    %v106 = vld [vmem:[#allocation2 + $0x1f8] sm:$0xff]
    %v107 = vld [vmem:[#allocation2 + $0x200] sm:$0xff]
    %v108 = vld [vmem:[#allocation2 + $0x208] sm:$0xff]
    %v109 = vld [vmem:[#allocation2 + $0x210] sm:$0xff]
    %v110 = vld [vmem:[#allocation2 + $0x218] sm:$0xff]
    %v111 = vld [vmem:[#allocation2 + $0x220] sm:$0xff]
    %v112 = vld [vmem:[#allocation2 + $0x228] sm:$0xff]
    %v113 = vld [vmem:[#allocation2 + $0x230] sm:$0xff]
    %v114 = vld [vmem:[#allocation2 + $0x238] sm:$0xff]
    %v115 = vld [vmem:[#allocation2 + $0x240] sm:$0xff]
    %v116 = vld [vmem:[#allocation2 + $0x248] sm:$0xff]
    %v117 = vld [vmem:[#allocation2 + $0x250] sm:$0xff]
    %v118 = vld [vmem:[#allocation2 + $0x258] sm:$0xff]
    %v119 = vld [vmem:[#allocation2 + $0x260] sm:$0xff]
    %v120 = vld [vmem:[#allocation2 + $0x268] sm:$0xff]
    %v121 = vld [vmem:[#allocation2 + $0x270] sm:$0xff]
    %v122 = vld [vmem:[#allocation2 + $0x278] sm:$0xff]
    %v123 = vld [vmem:[#allocation2 + $0x280] sm:$0xff]
    %v124 = vld [vmem:[#allocation2 + $0x288] sm:$0xff]
    %v125 = vld [vmem:[#allocation2 + $0x290] sm:$0xff]
    %v126 = vld [vmem:[#allocation2 + $0x298] sm:$0xff]
    %v127 = vld [vmem:[#allocation2 + $0x2a0] sm:$0xff]
    %v128 = vld [vmem:[#allocation2 + $0x2a8] sm:$0xff]
    %v129 = vld [vmem:[#allocation2 + $0x2b0] sm:$0xff]
    %v130 = vld [vmem:[#allocation2 + $0x2b8] sm:$0xff]
    %v131 = vld [vmem:[#allocation2 + $0x2c0] sm:$0xff]
    %v132 = vld [vmem:[#allocation2 + $0x2c8] sm:$0xff]
    %v133 = vld [vmem:[#allocation2 + $0x2d0] sm:$0xff]
    %v134 = vld [vmem:[#allocation2 + $0x2d8] sm:$0xff]
    %v135 = vld [vmem:[#allocation2 + $0x2e0] sm:$0xff]
    %v136 = vld [vmem:[#allocation2 + $0x2e8] sm:$0xff]
    %v137 = vld [vmem:[#allocation2 + $0x2f0] sm:$0xff]
    %v138 = vld [vmem:[#allocation2 + $0x2f8] sm:$0xff]
    %v139 = vld [vmem:[#allocation2 + $0x300] sm:$0xff]
    %v140 = vld [vmem:[#allocation2 + $0x308] sm:$0xff]
    %v141 = vld [vmem:[#allocation2 + $0x310] sm:$0xff]
    %v142 = vld [vmem:[#allocation2 + $0x318] sm:$0xff]
    %v143 = vld [vmem:[#allocation2 + $0x320] sm:$0xff]
    %v144 = vld [vmem:[#allocation2 + $0x328] sm:$0xff]
    %v145 = vld [vmem:[#allocation2 + $0x330] sm:$0xff]
    %v146 = vld [vmem:[#allocation2 + $0x338] sm:$0xff]
    %v147 = vld [vmem:[#allocation2 + $0x340] sm:$0xff]
    %v148 = vld [vmem:[#allocation2 + $0x348] sm:$0xff]
    %v149 = vld [vmem:[#allocation2 + $0x350] sm:$0xff]
    %v150 = vld [vmem:[#allocation2 + $0x358] sm:$0xff]
    %v151 = vld [vmem:[#allocation2 + $0x360] sm:$0xff]
    %v152 = vld [vmem:[#allocation2 + $0x368] sm:$0xff]
    %v153 = vld [vmem:[#allocation2 + $0x370] sm:$0xff]
    %v154 = vld [vmem:[#allocation2 + $0x378] sm:$0xff]
    %v155 = vld [vmem:[#allocation2 + $0x380] sm:$0xff]
    %v156 = vld [vmem:[#allocation2 + $0x388] sm:$0xff]
    %v157 = vld [vmem:[#allocation2 + $0x390] sm:$0xff]
    %v158 = vld [vmem:[#allocation2 + $0x398] sm:$0xff]
    %v159 = vld [vmem:[#allocation2 + $0x3a0] sm:$0xff]
    %v160 = vld [vmem:[#allocation2 + $0x3a8] sm:$0xff]
    %v161 = vld [vmem:[#allocation2 + $0x3b0] sm:$0xff]
    %v162 = vld [vmem:[#allocation2 + $0x3b8] sm:$0xff]
    %v163 = vld [vmem:[#allocation2 + $0x3c0] sm:$0xff]
    %v164 = vld [vmem:[#allocation2 + $0x3c8] sm:$0xff]
    %v165 = vld [vmem:[#allocation2 + $0x3d0] sm:$0xff]
    %v166 = vld [vmem:[#allocation2 + $0x3d8] sm:$0xff]
    %v167 = vld [vmem:[#allocation2 + $0x3e0] sm:$0xff]
    %v168 = vld [vmem:[#allocation2 + $0x3e8] sm:$0xff]
    %v169 = vld [vmem:[#allocation2 + $0x3f0] sm:$0xff]
    %v170 = vld [vmem:[#allocation2 + $0x3f8] sm:$0xff]
    %v171 = vld [vmem:[%s2] sm:$0x1]
    %v173 = vlaneseq
    %v174 = vshrl.u32 %v173, 7
    %v175 = vsub.s32 0, %v174
    %v176 = vrot.slane %v171, %v175
    %178 = vmatprep.subr.mxu0 0.0
    %179 = vmatpush1.msra.mxu0 %v43
    %180 = vmatprep.subr.mxu0 0.0
    %181 = vmatpush1.msra.mxu0 %v44
    %182 = vmatprep.subr.mxu0 0.0
    %183 = vmatpush1.msra.mxu0 %v45
    %184 = vmatprep.subr.mxu0 0.0
    %185 = vmatpush1.msra.mxu0 %v46
    %186 = vmatprep.subr.mxu0 0.0
    %187 = vmatpush1.msra.mxu0 %v47
    %188 = vmatprep.subr.mxu0 0.0
    %189 = vmatpush1.msra.mxu0 %v48
    %190 = vmatprep.subr.mxu0 0.0
    %191 = vmatpush1.msra.mxu0 %v49
    %192 = vmatprep.subr.mxu0 0.0
    %193 = vmatpush1.msra.mxu0 %v50
    %194 = vmatprep.subr.mxu0 0.0
    %195 = vmatpush1.msra.mxu0 %v51
    %196 = vmatprep.subr.mxu0 0.0
    %197 = vmatpush1.msra.mxu0 %v52
    %198 = vmatprep.subr.mxu0 0.0
    %199 = vmatpush1.msra.mxu0 %v53
    %200 = vmatprep.subr.mxu0 0.0
    %201 = vmatpush1.msra.mxu0 %v54
    %202 = vmatprep.subr.mxu0 0.0
    %203 = vmatpush1.msra.mxu0 %v55
    %204 = vmatprep.subr.mxu0 0.0
    %205 = vmatpush1.msra.mxu0 %v56
    %206 = vmatprep.subr.mxu0 0.0
    %207 = vmatpush1.msra.mxu0 %v57
    %208 = vmatprep.subr.mxu0 0.0
    %209 = vmatpush1.msra.mxu0 %v58
    %210 = vmatprep.subr.mxu0 0.0
    %211 = vmatpush1.msra.mxu0 %v59
    %212 = vmatprep.subr.mxu0 0.0
    %213 = vmatpush1.msra.mxu0 %v60
    %214 = vmatprep.subr.mxu0 0.0
    %215 = vmatpush1.msra.mxu0 %v61
    %216 = vmatprep.subr.mxu0 0.0
    %217 = vmatpush1.msra.mxu0 %v62
    %218 = vmatprep.subr.mxu0 0.0
    %219 = vmatpush1.msra.mxu0 %v63
    %220 = vmatprep.subr.mxu0 0.0
    %221 = vmatpush1.msra.mxu0 %v64
    %222 = vmatprep.subr.mxu0 0.0
    %223 = vmatpush1.msra.mxu0 %v65
    %224 = vmatprep.subr.mxu0 0.0
    %225 = vmatpush1.msra.mxu0 %v66
    %226 = vmatprep.subr.mxu0 0.0
    %227 = vmatpush1.msra.mxu0 %v67
    %228 = vmatprep.subr.mxu0 0.0
    %229 = vmatpush1.msra.mxu0 %v68
    %230 = vmatprep.subr.mxu0 0.0
    %231 = vmatpush1.msra.mxu0 %v69
    %232 = vmatprep.subr.mxu0 0.0
    %233 = vmatpush1.msra.mxu0 %v70
    %234 = vmatprep.subr.mxu0 0.0
    %235 = vmatpush1.msra.mxu0 %v71
    %236 = vmatprep.subr.mxu0 0.0
    %237 = vmatpush1.msra.mxu0 %v72
    %238 = vmatprep.subr.mxu0 0.0
    %239 = vmatpush1.msra.mxu0 %v73
    %240 = vmatprep.subr.mxu0 0.0
    %241 = vmatpush1.msra.mxu0 %v74
    %242 = vmatprep.mubr.f32.mxu0 %v36
    %243 = vmatmul.mubr.f32.gmra.mrb[0].mxu0 %v35
    %v244 = vpop.f32.mrb[0].mxu0
    %v245 = vadd.f32 %v176, %v244
    %v246 = vpop.f32.mrb[0].mxu0
    %247 = vdwg.mxu0
    %248 = vmatprep.subr.mxu0 0.0
    %249 = vmatpush1.msra.mxu0 %v75
    %250 = vmatprep.subr.mxu0 0.0
    %251 = vmatpush1.msra.mxu0 %v76
    %252 = vmatprep.subr.mxu0 0.0
    %253 = vmatpush1.msra.mxu0 %v77
    %254 = vmatprep.subr.mxu0 0.0
    %255 = vmatpush1.msra.mxu0 %v78
    %256 = vmatprep.subr.mxu0 0.0
    %257 = vmatpush1.msra.mxu0 %v79
    %258 = vmatprep.subr.mxu0 0.0
    %259 = vmatpush1.msra.mxu0 %v80
    %260 = vmatprep.subr.mxu0 0.0
    %261 = vmatpush1.msra.mxu0 %v81
    %262 = vmatprep.subr.mxu0 0.0
    %263 = vmatpush1.msra.mxu0 %v82
    %264 = vmatprep.subr.mxu0 0.0
    %265 = vmatpush1.msra.mxu0 %v83
    %266 = vmatprep.subr.mxu0 0.0
    %267 = vmatpush1.msra.mxu0 %v84
    %268 = vmatprep.subr.mxu0 0.0
    %269 = vmatpush1.msra.mxu0 %v85
    %270 = vmatprep.subr.mxu0 0.0
    %271 = vmatpush1.msra.mxu0 %v86
    %272 = vmatprep.subr.mxu0 0.0
    %273 = vmatpush1.msra.mxu0 %v87
    %274 = vmatprep.subr.mxu0 0.0
    %275 = vmatpush1.msra.mxu0 %v88
    %276 = vmatprep.subr.mxu0 0.0
    %277 = vmatpush1.msra.mxu0 %v89
    %278 = vmatprep.subr.mxu0 0.0
    %279 = vmatpush1.msra.mxu0 %v90
    %280 = vmatprep.subr.mxu0 0.0
    %281 = vmatpush1.msra.mxu0 %v91
    %282 = vmatprep.subr.mxu0 0.0
    %283 = vmatpush1.msra.mxu0 %v92
    %284 = vmatprep.subr.mxu0 0.0
    %285 = vmatpush1.msra.mxu0 %v93
    %286 = vmatprep.subr.mxu0 0.0
    %287 = vmatpush1.msra.mxu0 %v94
    %288 = vmatprep.subr.mxu0 0.0
    %289 = vmatpush1.msra.mxu0 %v95
    %290 = vmatprep.subr.mxu0 0.0
    %291 = vmatpush1.msra.mxu0 %v96
    %292 = vmatprep.subr.mxu0 0.0
    %293 = vmatpush1.msra.mxu0 %v97
    %294 = vmatprep.subr.mxu0 0.0
    %295 = vmatpush1.msra.mxu0 %v98
    %296 = vmatprep.subr.mxu0 0.0
    %297 = vmatpush1.msra.mxu0 %v99
    %298 = vmatprep.subr.mxu0 0.0
    %299 = vmatpush1.msra.mxu0 %v100
    %300 = vmatprep.subr.mxu0 0.0
    %301 = vmatpush1.msra.mxu0 %v101
    %302 = vmatprep.subr.mxu0 0.0
    %303 = vmatpush1.msra.mxu0 %v102
    %304 = vmatprep.subr.mxu0 0.0
    %305 = vmatpush1.msra.mxu0 %v103
    %306 = vmatprep.subr.mxu0 0.0
    %307 = vmatpush1.msra.mxu0 %v104
    %308 = vmatprep.subr.mxu0 0.0
    %309 = vmatpush1.msra.mxu0 %v105
    %310 = vmatprep.subr.mxu0 0.0
    %311 = vmatpush1.msra.mxu0 %v106
    %312 = vmatprep.mubr.f32.mxu0 %v38
    %313 = vmatmul.mubr.f32.gmra.mrb[0].mxu0 %v37
    %v314 = vpop.f32.mrb[0].mxu0
    %v315 = vadd.f32 %v245, %v314
    %v316 = vpop.f32.mrb[0].mxu0
    %317 = vdwg.mxu0
    %318 = vmatprep.subr.mxu0 0.0
    %319 = vmatpush1.msra.mxu0 %v107
    %320 = vmatprep.subr.mxu0 0.0
    %321 = vmatpush1.msra.mxu0 %v108
    %322 = vmatprep.subr.mxu0 0.0
    %323 = vmatpush1.msra.mxu0 %v109
    %324 = vmatprep.subr.mxu0 0.0
    %325 = vmatpush1.msra.mxu0 %v110
    %326 = vmatprep.subr.mxu0 0.0
    %327 = vmatpush1.msra.mxu0 %v111
    %328 = vmatprep.subr.mxu0 0.0
    %329 = vmatpush1.msra.mxu0 %v112
    %330 = vmatprep.subr.mxu0 0.0
    %331 = vmatpush1.msra.mxu0 %v113
    %332 = vmatprep.subr.mxu0 0.0
    %333 = vmatpush1.msra.mxu0 %v114
    %334 = vmatprep.subr.mxu0 0.0
    %335 = vmatpush1.msra.mxu0 %v115
    %336 = vmatprep.subr.mxu0 0.0
    %337 = vmatpush1.msra.mxu0 %v116
    %338 = vmatprep.subr.mxu0 0.0
    %339 = vmatpush1.msra.mxu0 %v117
    %340 = vmatprep.subr.mxu0 0.0
    %341 = vmatpush1.msra.mxu0 %v118
    %342 = vmatprep.subr.mxu0 0.0
    %343 = vmatpush1.msra.mxu0 %v119
    %344 = vmatprep.subr.mxu0 0.0
    %345 = vmatpush1.msra.mxu0 %v120
    %346 = vmatprep.subr.mxu0 0.0
    %347 = vmatpush1.msra.mxu0 %v121
    %348 = vmatprep.subr.mxu0 0.0
    %349 = vmatpush1.msra.mxu0 %v122
    %350 = vmatprep.subr.mxu0 0.0
    %351 = vmatpush1.msra.mxu0 %v123
    %352 = vmatprep.subr.mxu0 0.0
    %353 = vmatpush1.msra.mxu0 %v124
    %354 = vmatprep.subr.mxu0 0.0
    %355 = vmatpush1.msra.mxu0 %v125
    %356 = vmatprep.subr.mxu0 0.0
    %357 = vmatpush1.msra.mxu0 %v126
    %358 = vmatprep.subr.mxu0 0.0
    %359 = vmatpush1.msra.mxu0 %v127
    %360 = vmatprep.subr.mxu0 0.0
    %361 = vmatpush1.msra.mxu0 %v128
    %362 = vmatprep.subr.mxu0 0.0
    %363 = vmatpush1.msra.mxu0 %v129
    %364 = vmatprep.subr.mxu0 0.0
    %365 = vmatpush1.msra.mxu0 %v130
    %366 = vmatprep.subr.mxu0 0.0
    %367 = vmatpush1.msra.mxu0 %v131
    %368 = vmatprep.subr.mxu0 0.0
    %369 = vmatpush1.msra.mxu0 %v132
    %370 = vmatprep.subr.mxu0 0.0
    %371 = vmatpush1.msra.mxu0 %v133
    %372 = vmatprep.subr.mxu0 0.0
    %373 = vmatpush1.msra.mxu0 %v134
    %374 = vmatprep.subr.mxu0 0.0
    %375 = vmatpush1.msra.mxu0 %v135
    %376 = vmatprep.subr.mxu0 0.0
    %377 = vmatpush1.msra.mxu0 %v136
    %378 = vmatprep.subr.mxu0 0.0
    %379 = vmatpush1.msra.mxu0 %v137
    %380 = vmatprep.subr.mxu0 0.0
    %381 = vmatpush1.msra.mxu0 %v138
    %382 = vmatprep.mubr.f32.mxu0 %v40
    %383 = vmatmul.mubr.f32.gmra.mrb[0].mxu0 %v39
    %v384 = vpop.f32.mrb[0].mxu0
    %v385 = vadd.f32 %v315, %v384
    %v386 = vpop.f32.mrb[0].mxu0
    %387 = vdwg.mxu0
    %388 = vmatprep.subr.mxu0 0.0
    %389 = vmatpush1.msra.mxu0 %v139
    %390 = vmatprep.subr.mxu0 0.0
    %391 = vmatpush1.msra.mxu0 %v140
    %392 = vmatprep.subr.mxu0 0.0
    %393 = vmatpush1.msra.mxu0 %v141
    %394 = vmatprep.subr.mxu0 0.0
    %395 = vmatpush1.msra.mxu0 %v142
    %396 = vmatprep.subr.mxu0 0.0
    %397 = vmatpush1.msra.mxu0 %v143
    %398 = vmatprep.subr.mxu0 0.0
    %399 = vmatpush1.msra.mxu0 %v144
    %400 = vmatprep.subr.mxu0 0.0
    %401 = vmatpush1.msra.mxu0 %v145
    %402 = vmatprep.subr.mxu0 0.0
    %403 = vmatpush1.msra.mxu0 %v146
    %404 = vmatprep.subr.mxu0 0.0
    %405 = vmatpush1.msra.mxu0 %v147
    %406 = vmatprep.subr.mxu0 0.0
    %407 = vmatpush1.msra.mxu0 %v148
    %408 = vmatprep.subr.mxu0 0.0
    %409 = vmatpush1.msra.mxu0 %v149
    %410 = vmatprep.subr.mxu0 0.0
    %411 = vmatpush1.msra.mxu0 %v150
    %412 = vmatprep.subr.mxu0 0.0
    %413 = vmatpush1.msra.mxu0 %v151
    %414 = vmatprep.subr.mxu0 0.0
    %415 = vmatpush1.msra.mxu0 %v152
    %416 = vmatprep.subr.mxu0 0.0
    %417 = vmatpush1.msra.mxu0 %v153
    %418 = vmatprep.subr.mxu0 0.0
    %419 = vmatpush1.msra.mxu0 %v154
    %420 = vmatprep.subr.mxu0 0.0
    %421 = vmatpush1.msra.mxu0 %v155
    %422 = vmatprep.subr.mxu0 0.0
    %423 = vmatpush1.msra.mxu0 %v156
    %424 = vmatprep.subr.mxu0 0.0
    %425 = vmatpush1.msra.mxu0 %v157
    %426 = vmatprep.subr.mxu0 0.0
    %427 = vmatpush1.msra.mxu0 %v158
    %428 = vmatprep.subr.mxu0 0.0
    %429 = vmatpush1.msra.mxu0 %v159
    %430 = vmatprep.subr.mxu0 0.0
    %431 = vmatpush1.msra.mxu0 %v160
    %432 = vmatprep.subr.mxu0 0.0
    %433 = vmatpush1.msra.mxu0 %v161
    %434 = vmatprep.subr.mxu0 0.0
    %435 = vmatpush1.msra.mxu0 %v162
    %436 = vmatprep.subr.mxu0 0.0
    %437 = vmatpush1.msra.mxu0 %v163
    %438 = vmatprep.subr.mxu0 0.0
    %439 = vmatpush1.msra.mxu0 %v164
    %440 = vmatprep.subr.mxu0 0.0
    %441 = vmatpush1.msra.mxu0 %v165
    %442 = vmatprep.subr.mxu0 0.0
    %443 = vmatpush1.msra.mxu0 %v166
    %444 = vmatprep.subr.mxu0 0.0
    %445 = vmatpush1.msra.mxu0 %v167
    %446 = vmatprep.subr.mxu0 0.0
    %447 = vmatpush1.msra.mxu0 %v168
    %448 = vmatprep.subr.mxu0 0.0
    %449 = vmatpush1.msra.mxu0 %v169
    %450 = vmatprep.subr.mxu0 0.0
    %451 = vmatpush1.msra.mxu0 %v170
    %452 = vmatprep.mubr.f32.mxu0 %v42
    %453 = vmatmul.mubr.f32.gmra.mrb[0].mxu0 %v41
    %v454 = vpop.f32.mrb[0].mxu0
    %v455 = vadd.f32 %v385, %v454
    %v456 = vpop.f32.mrb[0].mxu0
    %457 = vdwg.mxu0
    %vm458 = vcmask 810752
    %v459 = vsel %vm458, %v455, -inf
    %460 = vmax.xlane.f32.xlu0 %v459
    %v461 = vpop.xlane.xlu0 %460
    %v462 = vsub.f32 %v455, %v461
    %v463 = vmul.f32 %v462, 1.442695
    %v464 = vpow.pop %v463
    %466 = vrot.lane.b32.xlu0 %v464, 32
    %v467 = vpop.permute.xlu0 %466
    %vm469 = vcmask 23552
    %v470 = vsel %vm469, %v467, 0.0
    %471 = vadd.xlane.f32.xlu0 %v470
    %v472 = vpop.xlane.xlu0 %471
    %v473 = vrcp.pop %v472
    %v474 = vmul.f32 %v464, %v473
    %476 = vset.pattern.permute.xlu0 96
    %477 = vperm.xlu0 %476, %v474
    %v478 = vpop.permute.xlu0 %477
    %v480 = vmul.f32 %v478, %v455
    %481 = vset.pattern.permute.xlu0 97
    %482 = vperm.xlu0 %481, %v474
    %v483 = vpop.permute.xlu0 %482
    %v485 = vmul.f32 %v483, %v455
    %487 = vrot.lane.b32.xlu0 %v485, 96
    %v488 = vpop.permute.xlu0 %487
    %v490 = vadd.f32 %v480, %v488
    %491 = vset.pattern.permute.xlu0 98
    %492 = vperm.xlu0 %491, %v474
    %v493 = vpop.permute.xlu0 %492
    %v495 = vmul.f32 %v493, %v455
    %497 = vrot.lane.b32.xlu0 %v495, 64
    %v498 = vpop.permute.xlu0 %497
    %v500 = vadd.f32 %v490, %v498
    %vm501 = vcmask 835352
    %v502 = vsel %vm501, %v455, -inf
    %503 = vmax.xlane.f32.xlu0 %v502
    %v504 = vpop.xlane.xlu0 %503
    %v505 = vsub.f32 %v455, %v504
    %v506 = vmul.f32 %v505, 1.442695
    %v507 = vpow.pop %v506
    %509 = vrot.lane.b32.xlu0 %v507, 29
    %v510 = vpop.permute.xlu0 %509
    %v512 = vsel %vm469, %v510, 0.0
    %513 = vadd.xlane.f32.xlu0 %v512
    %v514 = vpop.xlane.xlu0 %513
    %v515 = vrcp.pop %v514
    %v516 = vmul.f32 %v507, %v515
    %518 = vset.pattern.permute.xlu0 99
    %519 = vperm.xlu0 %518, %v516
    %v520 = vpop.permute.xlu0 %519
    %v522 = vmul.f32 %v520, %v455
    %523 = vset.pattern.permute.xlu0 100
    %524 = vperm.xlu0 %523, %v516
    %v525 = vpop.permute.xlu0 %524
    %v527 = vmul.f32 %v525, %v455
    %529 = vrot.lane.b32.xlu0 %v527, 96
    %v530 = vpop.permute.xlu0 %529
    %v532 = vadd.f32 %v522, %v530
    %533 = vset.pattern.permute.xlu0 101
    %534 = vperm.xlu0 %533, %v516
    %v535 = vpop.permute.xlu0 %534
    %v537 = vmul.f32 %v535, %v455
    %539 = vrot.lane.b32.xlu0 %v537, 64
    %v540 = vpop.permute.xlu0 %539
    %v542 = vadd.f32 %v532, %v540
    %544 = vrot.lane.b32.xlu0 %v542, 32
    %v545 = vpop.permute.xlu0 %544
    %vm547 = vcmask 261120
    %v548 = vsel %vm547, %v500, %v545
    %v549 = vld [vmem:[%s3] sm:$0xff]
    %v550 = vld [vmem:[%s3 + $0x8] sm:$0xff]
    %v551 = vld [vmem:[%s3 + $0x10] sm:$0xff]
    %v552 = vld [vmem:[%s3 + $0x18] sm:$0xff]
    %v553 = vld [vmem:[%s3 + $0x20] sm:$0xff]
    %v554 = vld [vmem:[%s3 + $0x28] sm:$0xff]
    %v555 = vld [vmem:[%s3 + $0x30] sm:$0xff]
    %v556 = vld [vmem:[%s3 + $0x38] sm:$0xff]
    %v557 = vld [vmem:[%s4] sm:$0x1]
    %v559 = vlaneseq
    %v560 = vshrl.u32 %v559, 7
    %v561 = vsub.s32 0, %v560
    %v562 = vrot.slane %v557, %v561
    %vm564 = vcmask 523264
    %v566 = vsel %vm564, %v548, 0
    %568 = vmatprep.subr.mxu0 0.0
    %569 = vmatpush1.msra.mxu0 %v549
    %570 = vmatprep.subr.mxu0 0.0
    %571 = vmatpush1.msra.mxu0 %v550
    %572 = vmatprep.subr.mxu0 0.0
    %573 = vmatpush1.msra.mxu0 %v551
    %574 = vmatprep.subr.mxu0 0.0
    %575 = vmatpush1.msra.mxu0 %v552
    %576 = vmatprep.subr.mxu0 0.0
    %577 = vmatpush1.msra.mxu0 %v553
    %578 = vmatprep.subr.mxu0 0.0
    %579 = vmatpush1.msra.mxu0 %v554
    %580 = vmatprep.subr.mxu0 0.0
    %581 = vmatpush1.msra.mxu0 %v555
    %582 = vmatprep.subr.mxu0 0.0
    %583 = vmatpush1.msra.mxu0 %v556
    %584 = vmatprep.subr.mxu0 0.0
    %585 = vmatpush1.msra.mxu0 0.0
    %586 = vmatprep.subr.mxu0 0.0
    %587 = vmatpush1.msra.mxu0 0.0
    %588 = vmatprep.subr.mxu0 0.0
    %589 = vmatpush1.msra.mxu0 0.0
    %590 = vmatprep.subr.mxu0 0.0
    %591 = vmatpush1.msra.mxu0 0.0
    %592 = vmatprep.subr.mxu0 0.0
    %593 = vmatpush1.msra.mxu0 0.0
    %594 = vmatprep.subr.mxu0 0.0
    %595 = vmatpush1.msra.mxu0 0.0
    %596 = vmatprep.subr.mxu0 0.0
    %597 = vmatpush1.msra.mxu0 0.0
    %598 = vmatprep.subr.mxu0 0.0
    %599 = vmatpush1.msra.mxu0 0.0
    %600 = vmatprep.subr.mxu0 0.0
    %601 = vmatpush1.msra.mxu0 0.0
    %602 = vmatprep.subr.mxu0 0.0
    %603 = vmatpush1.msra.mxu0 0.0
    %604 = vmatprep.subr.mxu0 0.0
    %605 = vmatpush1.msra.mxu0 0.0
    %606 = vmatprep.subr.mxu0 0.0
    %607 = vmatpush1.msra.mxu0 0.0
    %608 = vmatprep.subr.mxu0 0.0
    %609 = vmatpush1.msra.mxu0 0.0
    %610 = vmatprep.subr.mxu0 0.0
    %611 = vmatpush1.msra.mxu0 0.0
    %612 = vmatprep.subr.mxu0 0.0
    %613 = vmatpush1.msra.mxu0 0.0
    %614 = vmatprep.subr.mxu0 0.0
    %615 = vmatpush1.msra.mxu0 0.0
    %616 = vmatprep.subr.mxu0 0.0
    %617 = vmatpush1.msra.mxu0 0.0
    %618 = vmatprep.subr.mxu0 0.0
    %619 = vmatpush1.msra.mxu0 0.0
    %620 = vmatprep.subr.mxu0 0.0
    %621 = vmatpush1.msra.mxu0 0.0
    %622 = vmatprep.subr.mxu0 0.0
    %623 = vmatpush1.msra.mxu0 0.0
    %624 = vmatprep.subr.mxu0 0.0
    %625 = vmatpush1.msra.mxu0 0.0
    %626 = vmatprep.subr.mxu0 0.0
    %627 = vmatpush1.msra.mxu0 0.0
    %628 = vmatprep.subr.mxu0 0.0
    %629 = vmatpush1.msra.mxu0 0.0
    %630 = vmatprep.subr.mxu0 0.0
    %631 = vmatpush1.msra.mxu0 0.0
    %632 = vmatprep.mubr.f32.mxu0 0.0
    %633 = vmatmul.mubr.f32.gmra.mrb[0].mxu0 %v566
    %v634 = vpop.f32.mrb[0].mxu0
    %v635 = vadd.f32 %v562, %v634
    %v636 = vpop.f32.mrb[0].mxu0
    %637 = vdwg.mxu0
    %638 = vrot.lane.b32.xlu0 %v474, 32
    %v639 = vpop.permute.xlu0 %638
    %641 = vrot.lane.b32.xlu0 %v516, 32
    %v642 = vpop.permute.xlu0 %641
    %v644 = vsel %vm469, %v639, %v642
    %646 = vrot.lane.b32.xlu0 %v644, 6
    %v647 = vpop.permute.xlu0 %646
    %vm649 = vcmask 48128
    %v650 = vsel %vm649, %v635, %v647
    %vm651 = vcmask 97280
    %v652 = vsel %vm651, %v650, 0.0
    %653 = vst [vmem:[#allocation5] sm:$0xff] %v652
    // Predicated region
    $region26: #{tpu_custom_call.1} parent=1 // pred_check
      _
    $region27: #{tpu_custom_call.1} parent=1 // pred_check_branch
      %655 = sbr.rel (0) target = $region29
    $region28: #{tpu_custom_call.1} parent=1 // pred_region
      %s657 = ssub.s32 128, 128
      %658 = vsyncadd [#allocation4], %s657
      %s660 = sshll.u32 [#allocation5], 4
      %s661 = int_to_ptr.vmem [resolvable:$true] %s660
      %663 = dma.vmem_to_hbm [thread:$0]  %s661, 128, %s5, [#allocation4]
    $region29: #{tpu_custom_call.1} parent=1 // pred_fallthru
      _
    // Predicated region
    $region30: #{tpu_custom_call.1} parent=1 // pred_check
      _
    $region31: #{tpu_custom_call.1} parent=1 // pred_check_branch
      %665 = sbr.rel (0) target = $region33
    $region32: #{tpu_custom_call.1} parent=1 // pred_region
      %666 = dma.done [#allocation4], 128
    $region33: #{tpu_custom_call.1} parent=1 // pred_fallthru
      _
    %667 = vsyncpa [#allocation3], 1
    %668 = vsyncpa [#allocation4], 1

</llo_original>
